<compile_context>
chip_gen: v5e
topology: v5e:2x2
jax: 0.10.0
libtpu: 0.0.40
codegen_flags: <defaults>
</compile_context>

<pallas_src>
import math

import jax
import jax.numpy as jnp
from jax.experimental import pallas as pl
from jax.experimental.pallas import tpu as pltpu


def _make_kernel(scale, mask_flag, has_mask_input, output_attention):
    """Builds a kernel variant; optional inputs/outputs are compiled away."""

    def kernel(*refs):
        q_ref, k_ref, v_ref = refs[0], refs[1], refs[2]
        i = 3
        m_ref = None
        if has_mask_input:
            m_ref = refs[i]
            i += 1
        o_ref = refs[i]
        i += 1
        a_ref = refs[i] if output_attention else None

        Tq, Hb, Dk = q_ref.shape[1], q_ref.shape[2], q_ref.shape[3]
        T = k_ref.shape[1]
        Dv = v_ref.shape[3]

        # Native (T, H, D) blocks -> head-leading, VMEM-local relayout.
        # Softmax scale is folded into Q here (O(Tq*Hb*Dk) multiply).
        q = jnp.swapaxes(q_ref[0] * scale, 0, 1)   # (Hb, Tq, Dk)
        k = jnp.swapaxes(k_ref[0], 0, 1)           # (Hb, T,  Dk)
        v = jnp.swapaxes(v_ref[0], 0, 1)           # (Hb, T,  Dv)

        # scores[h, t, s] = sum_e q[h, t, e] * k[h, s, e]
        scores = jnp.einsum('hte,hse->hts', q, k,
                            preferred_element_type=jnp.float32)   # (Hb, Tq, T)

        if mask_flag:
            if has_mask_input:
                masked = m_ref[0] != 0             # (1|Hb, Tq, T), broadcasts
            else:
                # Strict upper-triangular (key index > query index), in-kernel.
                t0 = pl.program_id(2) * Tq
                row = jax.lax.broadcasted_iota(jnp.int32, scores.shape, 1) + t0
                col = jax.lax.broadcasted_iota(jnp.int32, scores.shape, 2)
                masked = col > row
            # NOTE: a fully-masked row yields NaN (same as the torch ref); the
            # built-in strict-triu mask always leaves the diagonal live.
            scores = jnp.where(masked, -jnp.inf, scores)

        # Numerically-stable softmax over the key/time axis.
        m_max = jnp.max(scores, axis=-1, keepdims=True)
        e = jnp.exp(scores - m_max)                         # (Hb, Tq, T)
        denom = jnp.sum(e, axis=-1, keepdims=True)          # (Hb, Tq, 1)
        inv = pl.reciprocal(denom, approx=True)             # EUP slot (~free)

        # Normalize after the PV matmul: scales (Tq, Dv) instead of (Tq, T).
        out = jnp.einsum('hts,hsd->htd', e.astype(v.dtype), v,
                         preferred_element_type=jnp.float32) * inv   # (Hb,Tq,Dv)

        # Lane-dense write: (Tq, Hb*Dv) slab in the native time-major layout.
        o_ref[0] = jnp.swapaxes(out, 0, 1).reshape(Tq, Hb * Dv).astype(o_ref.dtype)

        if output_attention:
            # Exact normalization for the returned attention matrix.
            a_ref[0] = (e * (1.0 / denom)).astype(a_ref.dtype)

    return kernel


def _largest_divisor_multiple_of(total, target, mult):
    best = None
    d = mult
    while d <= min(target, total):
        if total % d == 0:
            best = d
        d += mult
    return best


def _pick_query_block(T, Hb, B, grid_h, mult):
    """Pick a query-tile size: bound quadratic VMEM temporaries and give the
    second TensorCore (v7x) something to do when the grid would otherwise be
    a single step."""
    # scores + exp temporaries cost 2 * 4 * Hb * Tq * T bytes (f32).
    tmp_budget = 8 << 20
    max_rows = max(mult, tmp_budget // max(1, 8 * Hb * T))
    target = min(T, max_rows)
    if B * grid_h < 2 and T >= 2 * mult:
        target = min(target, T // 2)
    if target >= T:
        return T
    best = _largest_divisor_multiple_of(T, target, mult)
    return best if best is not None else T


def temporal_full_attention(queries, keys, values, attention_mask=None, *,
                            scale=None, mask_flag=False,
                            output_attention=False, head_block=None,
                            query_block=None):
    """queries/keys: (B, T, H, d_k), values: (B, T, H, d_v).
    Returns (V: (B, T, H, d_v), A: (B, H, T, T) or None)."""
    B, T, H, Dk = queries.shape
    Dv = values.shape[-1]
    scale = float(scale) if scale is not None else 1.0 / math.sqrt(Dk)
    itemsize = jnp.dtype(queries.dtype).itemsize

    Hb = H if head_block is None else int(head_block)
    if H % Hb != 0 or not (Hb == H or Hb % 8 == 0):
        raise ValueError("head_block must divide n_heads and be either "
                         "n_heads or a multiple of 8 (TPU sublane tiling)")
    grid_h = H // Hb

    has_mask_input = bool(mask_flag) and (attention_mask is not None)

    # Query-tile size: multiples of 32 are safe for every dtype's sublane tile.
    if query_block is None:
        Tq = _pick_query_block(T, Hb, B, grid_h, mult=32)
    else:
        Tq = int(query_block)
    if T % Tq != 0 or not (Tq == T or Tq % 32 == 0):
        raise ValueError("query_block must divide T and be either T or a "
                         "multiple of 32")
    grid_t = T // Tq

    # --- input specs (native (B, T, H, D) layout, no wrapper transposes) ----
    in_specs = [
        pl.BlockSpec((1, Tq, Hb, Dk), lambda b, h, t: (b, t, h, 0)),
        pl.BlockSpec((1, T, Hb, Dk), lambda b, h, t: (b, 0, h, 0)),
        pl.BlockSpec((1, T, Hb, Dv), lambda b, h, t: (b, 0, h, 0)),
    ]
    inputs = [queries, keys, values]

    mask_block_bytes = 0
    mask_hbm_bytes = 0
    if has_mask_input:
        m = jnp.asarray(attention_mask)
        if m.ndim == 2:
            m = m[None, None, :, :]
        elif m.ndim == 3:
            m = m[:, None, :, :]
        if (m.ndim != 4 or m.shape[-2:] != (T, T)
                or m.shape[0] not in (1, B) or m.shape[1] not in (1, H)):
            raise ValueError(
                f"attention_mask shape {tuple(jnp.shape(attention_mask))} is "
                f"not broadcastable to {(B, H, T, T)}")
        m = m.astype(jnp.int8)          # nonzero == masked; 4x less DMA vs int32
        mB, mH = m.shape[0], m.shape[1]
        mb_h = Hb if mH == H else 1

        def m_index(b, h, t, _bb=(mB == 1), _bh=(mH != H)):
            return (0 if _bb else b, 0 if _bh else h, t, 0)

        in_specs.append(pl.BlockSpec((1, mb_h, Tq, T), m_index))
        inputs.append(m)
        mask_block_bytes = mb_h * Tq * T
        mask_hbm_bytes = int(m.size)

    # --- output specs (lane-dense (Tq, Hb*Dv) slab per step) ---------------
    out_specs = [pl.BlockSpec((1, Tq, Hb * Dv), lambda b, h, t: (b, t, h))]
    out_shape = [jax.ShapeDtypeStruct((B, T, H * Dv), queries.dtype)]
    attn_block_bytes = 0
    if output_attention:
        out_specs.append(pl.BlockSpec((1, Hb, Tq, T), lambda b, h, t: (b, h, t, 0)))
        out_shape.append(jax.ShapeDtypeStruct((B, H, T, T), queries.dtype))
        attn_block_bytes = Hb * Tq * T * itemsize

    # --- VMEM budget computed from the actual per-step footprint -----------
    block_bytes = itemsize * (Tq * Hb * Dk      # q
                              + T * Hb * Dk     # k
                              + T * Hb * Dv     # v
                              + Tq * Hb * Dv)   # out
    block_bytes += mask_block_bytes + attn_block_bytes
    temp_bytes = 2 * 4 * Hb * Tq * T            # scores + exp (f32)
    footprint = 2 * block_bytes + temp_bytes    # blocks are double-buffered
    vmem_limit = int(min(max(2 * footprint, 32 << 20), 64 << 20))

    # --- cost estimate so XLA can overlap surrounding ops ------------------
    flops = 2 * B * H * T * T * (Dk + Dv)
    transcendentals = B * H * T * T
    bytes_accessed = itemsize * (queries.size + keys.size + values.size
                                 + B * T * H * Dv)
    bytes_accessed += mask_hbm_bytes
    if output_attention:
        bytes_accessed += B * H * T * T * itemsize

    kernel = _make_kernel(scale, bool(mask_flag), has_mask_input,
                          bool(output_attention))

    results = pl.pallas_call(
        kernel,
        grid=(B, grid_h, grid_t),
        in_specs=in_specs,
        out_specs=out_specs,
        out_shape=out_shape,
        compiler_params=pltpu.CompilerParams(
            dimension_semantics=("parallel", "parallel", "parallel"),
            vmem_limit_bytes=vmem_limit),
        cost_estimate=pl.CostEstimate(flops=int(flops),
                                      transcendentals=int(transcendentals),
                                      bytes_accessed=int(bytes_accessed)),
    )(*inputs)

    if output_attention:
        out, attn = results
    else:
        (out,) = results
        attn = None

    V = out.reshape(B, T, H, Dv)   # contiguous split of the last dim: free
    return (V, attn) if output_attention else (V, None)


def _reference(queries, keys, values, *, scale=None, mask_flag=False):
    B, T, H, Dk = queries.shape
    scale = scale if scale is not None else 1.0 / math.sqrt(Dk)
    scores = jnp.einsum('bthe,bshe->bhts', queries, keys)
    if mask_flag:
        tri = jnp.triu(jnp.ones((T, T), dtype=bool), k=1)
        scores = jnp.where(tri[None, None], -jnp.inf, scores)
    A = jax.nn.softmax(scale * scores, axis=-1)
    V = jnp.einsum('bhts,bshd->bthd', A, values)
    return V, A


if __name__ == "__main__":
    # Module params d_model=64, n_heads=4 imply per-head dims d_k = d_v = 16.
    B, T, H, Dk, Dv = 2, 8, 4, 16, 16
    key = jax.random.PRNGKey(0)
    kq, kk, kv = jax.random.split(key, 3)
    queries = jax.random.normal(kq, (B, T, H, Dk), dtype=jnp.float32)
    keys_ = jax.random.normal(kk, (B, T, H, Dk), dtype=jnp.float32)
    values = jax.random.normal(kv, (B, T, H, Dv), dtype=jnp.float32)

    tol = 2e-2  # approx reciprocal in the V-path softmax denominator

    # 1) Lean path: no mask anywhere, no attention-matrix output.
    V1, A1 = temporal_full_attention(queries, keys_, values, None,
                                     mask_flag=False, output_attention=False)
    V1 = jax.block_until_ready(V1)
    V1_ref, _ = _reference(queries, keys_, values, mask_flag=False)
    assert A1 is None
    assert V1.shape == (B, T, H, Dv)
    assert jnp.max(jnp.abs(V1 - V1_ref)) < tol

    # 2) Causal mask generated in-kernel (no mask DMA), attention requested.
    V2, A2 = temporal_full_attention(queries, keys_, values, None,
                                     mask_flag=True, output_attention=True)
    V2 = jax.block_until_ready(V2)
    V2_ref, A2_ref = _reference(queries, keys_, values, mask_flag=True)
    assert A2.shape == (B, H, T, T)
    assert jnp.max(jnp.abs(V2 - V2_ref)) < tol
    assert jnp.max(jnp.abs(A2 - A2_ref)) < tol

    # 3) User-provided (T, T) mask: one int8 block reused across all b, h.
    tri = jnp.triu(jnp.ones((T, T), dtype=jnp.int32), k=1)
    V3, _ = temporal_full_attention(queries, keys_, values, tri,
                                    mask_flag=True, output_attention=False)
    V3 = jax.block_until_ready(V3)
    assert jnp.max(jnp.abs(V3 - V2_ref)) < tol

    # 4) User-provided (B, 1, T, T) mask (PyTorch TriangularCausalMask style).
    mask_b1 = jnp.broadcast_to(tri[None, None], (B, 1, T, T))
    V4, _ = temporal_full_attention(queries, keys_, values, mask_b1,
                                    mask_flag=True, output_attention=False)
    V4 = jax.block_until_ready(V4)
    assert jnp.max(jnp.abs(V4 - V2_ref)) < tol

    # 5) User-provided full (B, H, T, T) mask (per-head blocks DMA'd).
    mask_bh = jnp.broadcast_to(tri[None, None], (B, H, T, T))
    V5, _ = temporal_full_attention(queries, keys_, values, mask_bh,
                                    mask_flag=True, output_attention=False)
    V5 = jax.block_until_ready(V5)
    assert jnp.max(jnp.abs(V5 - V2_ref)) < tol

    print("KERNEL_OK")
</pallas_src>

<mosaic_0001>
module attributes {stable_mosaic.version = 11 : i64} {
  func.func @kernel(%arg0: i32, %arg1: i32, %arg2: i32, %arg3: memref<1x8x4x16xf32, #tpu.memory_space<vmem>>, %arg4: memref<1x8x4x16xf32, #tpu.memory_space<vmem>>, %arg5: memref<1x8x4x16xf32, #tpu.memory_space<vmem>>, %arg6: memref<1x8x64xf32, #tpu.memory_space<vmem>>) attributes {dimension_semantics = [#tpu.dimension_semantics<parallel>, #tpu.dimension_semantics<parallel>, #tpu.dimension_semantics<parallel>], iteration_bounds = array<i64: 2, 1, 1>, scalar_prefetch = 0 : i64, scratch_operands = 0 : i64, tpu.core_type = #tpu.core_type<tc>, window_params = [{transform_indices = @transform_0, window_bounds = array<i64: 1, 8, 4, 16>}, {transform_indices = @transform_1, window_bounds = array<i64: 1, 8, 4, 16>}, {transform_indices = @transform_2, window_bounds = array<i64: 1, 8, 4, 16>}, {transform_indices = @transform_3, window_bounds = array<i64: 1, 8, 64>}]} {
    %c0 = arith.constant 0 : index
    %c0_0 = arith.constant 0 : index
    %c0_1 = arith.constant 0 : index
    %c0_2 = arith.constant 0 : index
    %0 = vector.load %arg3[%c0, %c0_0, %c0_1, %c0_2] : memref<1x8x4x16xf32, #tpu.memory_space<vmem>>, vector<1x8x4x16xf32>
    %1 = vector.shape_cast %0 : vector<1x8x4x16xf32> to vector<8x4x16xf32>
    %cst = arith.constant 2.500000e-01 : f32
    %2 = vector.broadcast %cst : f32 to vector<8x4x16xf32>
    %3 = arith.mulf %1, %2 : vector<8x4x16xf32>
    %4 = tpu.transpose %3, [1, 0, 2] : vector<8x4x16xf32> -> vector<4x8x16xf32>
    %c0_3 = arith.constant 0 : index
    %c0_4 = arith.constant 0 : index
    %c0_5 = arith.constant 0 : index
    %c0_6 = arith.constant 0 : index
    %5 = vector.load %arg4[%c0_3, %c0_4, %c0_5, %c0_6] : memref<1x8x4x16xf32, #tpu.memory_space<vmem>>, vector<1x8x4x16xf32>
    %6 = vector.shape_cast %5 : vector<1x8x4x16xf32> to vector<8x4x16xf32>
    %7 = tpu.transpose %6, [1, 0, 2] : vector<8x4x16xf32> -> vector<4x8x16xf32>
    %c0_7 = arith.constant 0 : index
    %c0_8 = arith.constant 0 : index
    %c0_9 = arith.constant 0 : index
    %c0_10 = arith.constant 0 : index
    %8 = vector.load %arg5[%c0_7, %c0_8, %c0_9, %c0_10] : memref<1x8x4x16xf32, #tpu.memory_space<vmem>>, vector<1x8x4x16xf32>
    %9 = vector.shape_cast %8 : vector<1x8x4x16xf32> to vector<8x4x16xf32>
    %10 = tpu.transpose %9, [1, 0, 2] : vector<8x4x16xf32> -> vector<4x8x16xf32>
    "tpu.trace_start"() <{level = 10 : i32, message = "hte,hse->hts"}> : () -> ()
    %cst_11 = arith.constant dense<0.000000e+00> : vector<4x8x8xf32>
    %11 = tpu.matmul %4, %7, %cst_11 {dimension_numbers = #tpu.dot_dimension_numbers<[2], [2], [1], [1], [0, 0, 0, 1, 1, 1], [0], [0]>} : vector<4x8x16xf32>, vector<4x8x16xf32>, vector<4x8x8xf32> -> vector<4x8x8xf32>
    "tpu.trace_stop"() : () -> ()
    %cst_12 = arith.constant dense<0xFF800000> : vector<4x8xf32>
    %12 = vector.multi_reduction <maximumf>, %11, %cst_12 [2] : vector<4x8x8xf32> to vector<4x8xf32>
    %13 = vector.shape_cast %12 : vector<4x8xf32> to vector<4x8x1xf32>
    %14 = vector.broadcast %13 : vector<4x8x1xf32> to vector<4x8x8xf32>
    %15 = arith.subf %11, %14 : vector<4x8x8xf32>
    %16 = math.exp %15 : vector<4x8x8xf32>
    %cst_13 = arith.constant dense<0.000000e+00> : vector<4x8xf32>
    %17 = vector.multi_reduction <add>, %16, %cst_13 [2] : vector<4x8x8xf32> to vector<4x8xf32>
    %18 = vector.shape_cast %17 : vector<4x8xf32> to vector<4x8x1xf32>
    %19 = tpu.reciprocal %18 {approx = true} : vector<4x8x1xf32> -> vector<4x8x1xf32>
    "tpu.trace_start"() <{level = 10 : i32, message = "hts,hsd->htd"}> : () -> ()
    %cst_14 = arith.constant dense<0.000000e+00> : vector<4x8x16xf32>
    %20 = tpu.matmul %16, %10, %cst_14 {dimension_numbers = #tpu.dot_dimension_numbers<[2], [1], [1], [2], [0, 0, 0, 1, 1, 2], [0], [0]>} : vector<4x8x8xf32>, vector<4x8x16xf32>, vector<4x8x16xf32> -> vector<4x8x16xf32>
    "tpu.trace_stop"() : () -> ()
    %21 = vector.broadcast %19 : vector<4x8x1xf32> to vector<4x8x16xf32>
    %22 = arith.mulf %20, %21 : vector<4x8x16xf32>
    %23 = tpu.transpose %22, [1, 0, 2] : vector<4x8x16xf32> -> vector<8x4x16xf32>
    %24 = vector.shape_cast %23 : vector<8x4x16xf32> to vector<8x64xf32>
    %c0_15 = arith.constant 0 : index
    %c0_16 = arith.constant 0 : index
    %c0_17 = arith.constant 0 : index
    %25 = vector.load %arg6[%c0_15, %c0_16, %c0_17] : memref<1x8x64xf32, #tpu.memory_space<vmem>>, vector<1x8x64xf32>
    %26 = vector.shape_cast %25 : vector<1x8x64xf32> to vector<8x64xf32>
    %27 = vector.shape_cast %24 : vector<8x64xf32> to vector<1x8x64xf32>
    tpu.vector_store %arg6[%c0_15, %c0_16, %c0_17], %27 {strides = array<i32>} : memref<1x8x64xf32, #tpu.memory_space<vmem>>, vector<1x8x64xf32>,
    return
  }
  func.func @transform_0(%arg0: i32, %arg1: i32, %arg2: i32) -> (i32, i32, i32, i32) {
    %c0_i32 = arith.constant 0 : i32
    %c0_i32_0 = arith.constant 0 : i32
    return %arg0, %arg2, %arg1, %c0_i32 : i32, i32, i32, i32
  }
  func.func @transform_1(%arg0: i32, %arg1: i32, %arg2: i32) -> (i32, i32, i32, i32) {
    %c0_i32 = arith.constant 0 : i32
    %c0_i32_0 = arith.constant 0 : i32
    %c0_i32_1 = arith.constant 0 : i32
    return %arg0, %c0_i32, %arg1, %c0_i32_0 : i32, i32, i32, i32
  }
  func.func @transform_2(%arg0: i32, %arg1: i32, %arg2: i32) -> (i32, i32, i32, i32) {
    %c0_i32 = arith.constant 0 : i32
    %c0_i32_0 = arith.constant 0 : i32
    %c0_i32_1 = arith.constant 0 : i32
    return %arg0, %c0_i32, %arg1, %c0_i32_0 : i32, i32, i32, i32
  }
  func.func @transform_3(%arg0: i32, %arg1: i32, %arg2: i32) -> (i32, i32, i32) {
    %c0_i32 = arith.constant 0 : i32
    return %arg0, %arg2, %arg1 : i32, i32, i32
  }
}

</mosaic_0001>

<llo_original>
// kernel: tpu_custom_call.1
$region0: #{tpu_custom_call.1}
  #allocation0 [shape = 'u32[]', space=smem, size = 0x4, offset = 0x4, fixed_abs, tag = 'smem constant byte address 0x4 - core index']
  #allocation1 [shape = 'u32[72,128]{1,0:T(1,128)}', space=vmem, size = 0x9000, scoped, tag = 'internal scratch']
  %s0 = inlined_call_operand.hbm [shape: f32[2,8,4,16], index: 0, kind: input, shape index: {}]
  %s1 = inlined_call_operand.hbm [shape: f32[2,8,4,16], index: 1, kind: input, shape index: {}]
  %s2 = inlined_call_operand.hbm [shape: f32[2,8,4,16], index: 2, kind: input, shape index: {}]
  %s3 = inlined_call_operand.hbm [shape: f32[2,8,64], index: 3, kind: output, shape index: {}]
  %s4 = sld [smem:[#allocation0]]
  $region57: #{tpu_custom_call.1} parent=0
    _
  %s6 = ssub.s32 1, %s4
  %s7 = scalar_select 0, %s6, %s4
  $region1: #{tpu_custom_call.1} parent=0
    #allocation2 [shape = 'u8[32768]{0}', space=vmem, size = 0x8000, scoped, tag = 'input window, operand 0']
    #allocation3 [shape = 's32[2]{0}', space=sflag, size = 0x8, scoped, tag = 'scoped memory for tpu_custom_call.1']
    #allocation4 [shape = 's32[2]{0}', space=sflag, size = 0x8, scoped, tag = 'scoped memory for tpu_custom_call.1']
    #allocation5 [shape = 'u8[32768]{0}', space=vmem, size = 0x8000, scoped, tag = 'input window, operand 1']
    #allocation6 [shape = 's32[2]{0}', space=sflag, size = 0x8, scoped, tag = 'scoped memory for tpu_custom_call.1']
    #allocation7 [shape = 'u8[32768]{0}', space=vmem, size = 0x8000, scoped, tag = 'input window, operand 2']
    #allocation8 [shape = 'u8[8192]{0}', space=vmem, size = 0x2000, scoped, tag = 'output window, operand 0']
    %8 = vsyncpa [#allocation3], 0
    %s9 = scalar_lea.sflag [#allocation3], 1
    %10 = vsyncpa %s9, 0
    %11 = vsyncpa [#allocation6], 0
    %s12 = scalar_lea.sflag [#allocation6], 1
    %13 = vsyncpa %s12, 0
    %14 = vsyncpa [#allocation4], 0
    %s15 = scalar_lea.sflag [#allocation4], 1
    %16 = vsyncpa %s15, 0
    loop: start=0, step=1, limit=4
    $region2: #{tpu_custom_call.1} parent=1 // loop_pre_header
      _
    $region3: #{tpu_custom_call.1} parent=1 // loop_header
      %s18 = sphi 0, %s22
      %p19 = scmp.ge.s32.totalorder %s18, 4
      %s25 = sphi 0, %s44
      %s26 = sphi 0, %s40
      %s27 = sphi 0, %s36
      %s28 = sphi 0, %s25
      %s29 = sphi 0, %s26
      %s30 = sphi 0, %s27
      %s31 = sphi 0, %s28
      %s32 = sphi 0, %s29
      %s33 = sphi 0, %s30
      %s51 = sphi 0, %s53
      %s54 = sphi 0, %s51
      %s55 = sphi 0, %s54
      %s71 = sphi 0, %s55
      %s79 = sphi 0, %s81
      %s82 = sphi 0, %s79
      %s83 = sphi 0, %s82
      %s99 = sphi 0, %s83
      %s107 = sphi 0, %s109
      %s110 = sphi 0, %s107
      %s111 = sphi 0, %s110
      %s127 = sphi 0, %s111
      %s137 = sphi 0, %s139
      %s140 = sphi 0, %s137
      %s141 = sphi 0, %s140
      %s157 = sphi 0, %s141
    $region4: #{tpu_custom_call.1} parent=1 // loop_header_branch
      %21 = sbr.rel (%p19) target = $region8
    $region5: #{tpu_custom_call.1} parent=1 // loop_body
      %s23 = ssub.s32 %s18, 1
      %s24 = ssub.s32 %s18, 2
      %s34 = sadd.s32 1, %s27
      %p35 = scmp.ge.s32.totalorder %s34, 1
      %s36 = scalar_select %p35, 0, %s34
      %s37 = sadd.s32 1, %s26
      %s38 = scalar_select %p35, %s37, %s26
      %p39 = scmp.ge.s32.totalorder %s38, 1
      %s40 = scalar_select %p39, 0, %s38
      %s41 = sadd.s32 1, %s25
      %s42 = scalar_select %p39, %s41, %s25
      %p43 = scmp.ge.s32.totalorder %s42, 2
      %s44 = scalar_select %p43, 0, %s42
      %s45 = ssub.s32 %s25, %s44
      %s46 = ssub.s32 %s27, %s36
      %s47 = sor.u32 %s45, %s46
      %s48 = ssub.s32 %s26, %s40
      %s49 = sor.u32 %s47, %s48
      %p50 = scmp.eq.s32.totalorder %s49, 0
      %s52 = sadd.s32 %s51, 1
      %s53 = scalar_select %p50, %s51, %s52
      %p56 = pneg %p50
      %p57 = scmp.eq.s32.totalorder %s18, 1
      %p58 = por %p56, %p57
      %p59 = scmp.ne.s32.totalorder %s51, %s54
      %p60 = scmp.eq.s32.totalorder %s18, 0
      %p61 = por %p59, %p60
      %p62 = scmp.ne.s32.totalorder %s51, %s54
      %p63 = scmp.eq.s32.totalorder %s23, 1
      %p64 = por %p62, %p63
      %p65 = scmp.ne.s32.totalorder %s54, %s55
      %p66 = scmp.eq.s32.totalorder %s23, 0
      %p67 = por %p65, %p66
      %p68 = scmp.ne.s32.totalorder %s54, %s55
      %p69 = scmp.eq.s32.totalorder %s24, 1
      %p70 = por %p68, %p69
      %p72 = scmp.ne.s32.totalorder %s55, %s71
      %p73 = scmp.eq.s32.totalorder %s24, 0
      %p74 = por %p72, %p73
      %s75 = ssub.s32 %s25, %s44
      %s76 = ssub.s32 %s26, %s40
      %s77 = sor.u32 %s75, %s76
      %p78 = scmp.eq.s32.totalorder %s77, 0
      %s80 = sadd.s32 %s79, 1
      %s81 = scalar_select %p78, %s79, %s80
      %p84 = pneg %p78
      %p85 = scmp.eq.s32.totalorder %s18, 1
      %p86 = por %p84, %p85
      %p87 = scmp.ne.s32.totalorder %s79, %s82
      %p88 = scmp.eq.s32.totalorder %s18, 0
      %p89 = por %p87, %p88
      %p90 = scmp.ne.s32.totalorder %s79, %s82
      %p91 = scmp.eq.s32.totalorder %s23, 1
      %p92 = por %p90, %p91
      %p93 = scmp.ne.s32.totalorder %s82, %s83
      %p94 = scmp.eq.s32.totalorder %s23, 0
      %p95 = por %p93, %p94
      %p96 = scmp.ne.s32.totalorder %s82, %s83
      %p97 = scmp.eq.s32.totalorder %s24, 1
      %p98 = por %p96, %p97
      %p100 = scmp.ne.s32.totalorder %s83, %s99
      %p101 = scmp.eq.s32.totalorder %s24, 0
      %p102 = por %p100, %p101
      %s103 = ssub.s32 %s25, %s44
      %s104 = ssub.s32 %s26, %s40
      %s105 = sor.u32 %s103, %s104
      %p106 = scmp.eq.s32.totalorder %s105, 0
      %s108 = sadd.s32 %s107, 1
      %s109 = scalar_select %p106, %s107, %s108
      %p112 = pneg %p106
      %p113 = scmp.eq.s32.totalorder %s18, 1
      %p114 = por %p112, %p113
      %p115 = scmp.ne.s32.totalorder %s107, %s110
      %p116 = scmp.eq.s32.totalorder %s18, 0
      %p117 = por %p115, %p116
      %p118 = scmp.ne.s32.totalorder %s107, %s110
      %p119 = scmp.eq.s32.totalorder %s23, 1
      %p120 = por %p118, %p119
      %p121 = scmp.ne.s32.totalorder %s110, %s111
      %p122 = scmp.eq.s32.totalorder %s23, 0
      %p123 = por %p121, %p122
      %p124 = scmp.ne.s32.totalorder %s110, %s111
      %p125 = scmp.eq.s32.totalorder %s24, 1
      %p126 = por %p124, %p125
      %p128 = scmp.ne.s32.totalorder %s111, %s127
      %p129 = scmp.eq.s32.totalorder %s24, 0
      %p130 = por %p128, %p129
      %s131 = ssub.s32 %s25, %s44
      %s132 = ssub.s32 %s27, %s36
      %s133 = sor.u32 %s131, %s132
      %s134 = ssub.s32 %s26, %s40
      %s135 = sor.u32 %s133, %s134
      %p136 = scmp.eq.s32.totalorder %s135, 0
      %s138 = sadd.s32 %s137, 1
      %s139 = scalar_select %p136, %s137, %s138
      %p142 = pneg %p136
      %p143 = scmp.eq.s32.totalorder %s18, 1
      %p144 = por %p142, %p143
      %p145 = scmp.ne.s32.totalorder %s137, %s140
      %p146 = scmp.eq.s32.totalorder %s18, 0
      %p147 = por %p145, %p146
      %p148 = scmp.ne.s32.totalorder %s137, %s140
      %p149 = scmp.eq.s32.totalorder %s23, 1
      %p150 = por %p148, %p149
      %p151 = scmp.ne.s32.totalorder %s140, %s141
      %p152 = scmp.eq.s32.totalorder %s23, 0
      %p153 = por %p151, %p152
      %p154 = scmp.ne.s32.totalorder %s140, %s141
      %p155 = scmp.eq.s32.totalorder %s24, 1
      %p156 = por %p154, %p155
      %p158 = scmp.ne.s32.totalorder %s141, %s157
      %p159 = scmp.eq.s32.totalorder %s24, 0
      %p160 = por %p158, %p159
      %p161 = scmp.le.s32.totalorder 1, %s18
      %p162 = scmp.lt.s32.totalorder %s18, 3
      %p163 = pnand %p161, %p162
      %p164 = pneg %p163
      // Predicated region
      $region9: #{tpu_custom_call.1} parent=5 // pred_check
        _
      $region10: #{tpu_custom_call.1} parent=5 // pred_check_branch
        %166 = sbr.rel (%p163) target = $region12
      $region11: #{tpu_custom_call.1} parent=5 // pred_region
        %s167 = ssub.s32 %s18, 1
      $region12: #{tpu_custom_call.1} parent=5 // pred_fallthru
        _
      %p168 = scmp.lt.s32.totalorder %s18, 2
      // Predicated region
      $region13: #{tpu_custom_call.1} parent=5 // pred_check
        %p169 = pneg %p168
      $region14: #{tpu_custom_call.1} parent=5 // pred_check_branch
        %171 = sbr.rel (%p169) target = $region16
      $region15: #{tpu_custom_call.1} parent=5 // pred_region
        // Predicated region
        $region17: #{tpu_custom_call.1} parent=15 // pred_check
          %p172 = pneg %p61
        $region18: #{tpu_custom_call.1} parent=15 // pred_check_branch
          %174 = sbr.rel (%p172) target = $region20
        $region19: #{tpu_custom_call.1} parent=15 // pred_region
          %s175 = sand.u32 %s51, 1
          %s176 = scalar_lea.sflag [#allocation3], %s175
          %s177 = sand.u32 %s51, 1
          %s178 = smul.addr %s177, 32
          %s179 = scalar_lea.vmem [#allocation2], %s178
          %s180 = smul.u32 8, %s27
          %182 = vsyncadd %s176, 0
          %s183 = sadd.s32 %s26, %s180
          %s184 = smul.addr %s25, 8
          %s185 = sadd.s32 %s183, %s184
          %s186 = smul.addr %s185, 4
          %s187 = scalar_lea.hbm %s0, %s186
          %s188 = sshll.u32 %s187, 4
          %s189 = int_to_ptr.hbm [resolvable:$true] %s188
          %s190 = sshll.u32 %s179, 4
          %s191 = int_to_ptr.vmem [resolvable:$true] %s190
          %196 = dma.hbm_to_vmem [thread:$0]  %s189, 512, %s191, %s176, 64, 64, 4
        $region20: #{tpu_custom_call.1} parent=15 // pred_fallthru
          _
        // Predicated region
        $region21: #{tpu_custom_call.1} parent=15 // pred_check
          %p197 = pneg %p89
        $region22: #{tpu_custom_call.1} parent=15 // pred_check_branch
          %199 = sbr.rel (%p197) target = $region24
        $region23: #{tpu_custom_call.1} parent=15 // pred_region
          %s200 = sand.u32 %s18, 1
          %s201 = scalar_lea.sflag [#allocation6], %s200
          %s202 = sand.u32 %s79, 1
          %s203 = smul.addr %s202, 32
          %s204 = scalar_lea.vmem [#allocation5], %s203
          %206 = vsyncadd %s201, 0
          %s207 = smul.addr %s25, 8
          %s208 = sadd.s32 %s26, %s207
          %s209 = smul.addr %s208, 4
          %s210 = scalar_lea.hbm %s1, %s209
          %s211 = sshll.u32 %s210, 4
          %s212 = int_to_ptr.hbm [resolvable:$true] %s211
          %s213 = sshll.u32 %s204, 4
          %s214 = int_to_ptr.vmem [resolvable:$true] %s213
          %219 = dma.hbm_to_vmem [thread:$0]  %s212, 512, %s214, %s201, 64, 64, 4
        $region24: #{tpu_custom_call.1} parent=15 // pred_fallthru
          _
        // Predicated region
        $region25: #{tpu_custom_call.1} parent=15 // pred_check
          %p220 = pneg %p117
        $region26: #{tpu_custom_call.1} parent=15 // pred_check_branch
          %222 = sbr.rel (%p220) target = $region28
        $region27: #{tpu_custom_call.1} parent=15 // pred_region
          %s223 = sand.u32 %s18, 1
          %s224 = scalar_lea.sflag [#allocation6], %s223
          %s225 = sand.u32 %s107, 1
          %s226 = smul.addr %s225, 32
          %s227 = scalar_lea.vmem [#allocation7], %s226
          %229 = vsyncadd %s224, 0
          %s230 = smul.addr %s25, 8
          %s231 = sadd.s32 %s26, %s230
          %s232 = smul.addr %s231, 4
          %s233 = scalar_lea.hbm %s2, %s232
          %s234 = sshll.u32 %s233, 4
          %s235 = int_to_ptr.hbm [resolvable:$true] %s234
          %s236 = sshll.u32 %s227, 4
          %s237 = int_to_ptr.vmem [resolvable:$true] %s236
          %242 = dma.hbm_to_vmem [thread:$0]  %s235, 512, %s237, %s224, 64, 64, 4
        $region28: #{tpu_custom_call.1} parent=15 // pred_fallthru
          _
      $region16: #{tpu_custom_call.1} parent=5 // pred_fallthru
        _
      %p243 = scmp.le.s32.totalorder 1, %s18
      %p244 = scmp.lt.s32.totalorder %s18, 3
      %p245 = pnand %p243, %p244
      %p246 = pneg %p245
      // Predicated region
      $region29: #{tpu_custom_call.1} parent=5 // pred_check
        _
      $region30: #{tpu_custom_call.1} parent=5 // pred_check_branch
        %248 = sbr.rel (%p245) target = $region32
      $region31: #{tpu_custom_call.1} parent=5 // pred_region
        %s249 = ssub.s32 %s18, 1
        %s250 = sand.u32 %s54, 1
        %s251 = scalar_lea.sflag [#allocation3], %s250
        %s252 = sand.u32 %s54, 1
        %s253 = smul.addr %s252, 32
        %s254 = scalar_lea.vmem [#allocation2], %s253
        // Predicated region
        $region33: #{tpu_custom_call.1} parent=31 // pred_check
          %p255 = pneg %p67
        $region34: #{tpu_custom_call.1} parent=31 // pred_check_branch
          %257 = sbr.rel (%p255) target = $region36
        $region35: #{tpu_custom_call.1} parent=31 // pred_region
          %259 = dma.done %s251, 512
        $region36: #{tpu_custom_call.1} parent=31 // pred_fallthru
          _
        %s260 = sand.u32 %s23, 1
        %s261 = scalar_lea.sflag [#allocation6], %s260
        %s262 = sand.u32 %s82, 1
        %s263 = smul.addr %s262, 32
        %s264 = scalar_lea.vmem [#allocation5], %s263
        // Predicated region
        $region37: #{tpu_custom_call.1} parent=31 // pred_check
          %p265 = pneg %p95
        $region38: #{tpu_custom_call.1} parent=31 // pred_check_branch
          %267 = sbr.rel (%p265) target = $region40
        $region39: #{tpu_custom_call.1} parent=31 // pred_region
          %269 = dma.done %s261, 512
        $region40: #{tpu_custom_call.1} parent=31 // pred_fallthru
          _
        %s270 = sand.u32 %s23, 1
        %s271 = scalar_lea.sflag [#allocation6], %s270
        %s272 = sand.u32 %s110, 1
        %s273 = smul.addr %s272, 32
        %s274 = scalar_lea.vmem [#allocation7], %s273
        // Predicated region
        $region41: #{tpu_custom_call.1} parent=31 // pred_check
          %p275 = pneg %p123
        $region42: #{tpu_custom_call.1} parent=31 // pred_check_branch
          %277 = sbr.rel (%p275) target = $region44
        $region43: #{tpu_custom_call.1} parent=31 // pred_region
          %279 = dma.done %s271, 512
        $region44: #{tpu_custom_call.1} parent=31 // pred_fallthru
          _
        %s280 = sand.u32 %s54, 1
        %s281 = scalar_lea.sflag [#allocation3], %s280
        %s282 = sand.u32 %s54, 1
        %s283 = smul.addr %s282, 32
        %s284 = scalar_lea.vmem [#allocation2], %s283
        %p285 = pneg %p67
        %p286 = pneg %p64
        %s287 = sand.u32 %s23, 1
        %s288 = scalar_lea.sflag [#allocation6], %s287
        %s289 = sand.u32 %s82, 1
        %s290 = smul.addr %s289, 32
        %s291 = scalar_lea.vmem [#allocation5], %s290
        %p292 = pneg %p95
        %p293 = pneg %p92
        %s294 = sand.u32 %s23, 1
        %s295 = scalar_lea.sflag [#allocation6], %s294
        %s296 = sand.u32 %s110, 1
        %s297 = smul.addr %s296, 32
        %s298 = scalar_lea.vmem [#allocation7], %s297
        %p299 = pneg %p123
        %p300 = pneg %p120
        %p301 = pneg %p153
        %p302 = pneg %p150
        %s303 = sand.u32 %s140, 1
        %s304 = scalar_lea.sflag [#allocation4], %s303
        %s305 = sand.u32 %s140, 1
        %s306 = smul.addr %s305, 8
        %s307 = scalar_lea.vmem [#allocation8], %s306
        %s308 = smul.u32 8, %s30
        %v309 = vld [vmem:[%s254] sm:$0xf]
        %v310 = vld [vmem:[%s254 + $0x4] sm:$0xf]
        %v311 = vld [vmem:[%s254 + $0x8] sm:$0xf]
        %v312 = vld [vmem:[%s254 + $0xc] sm:$0xf]
        %v313 = vld [vmem:[%s254 + $0x10] sm:$0xf]
        %v314 = vld [vmem:[%s254 + $0x14] sm:$0xf]
        %v315 = vld [vmem:[%s254 + $0x18] sm:$0xf]
        %v316 = vld [vmem:[%s254 + $0x1c] sm:$0xf]
        %v317 = vmul.f32 %v309, 0.25
        %v318 = vmul.f32 %v310, 0.25
        %v319 = vmul.f32 %v311, 0.25
        %v320 = vmul.f32 %v312, 0.25
        %v321 = vmul.f32 %v313, 0.25
        %v322 = vmul.f32 %v314, 0.25
        %v323 = vmul.f32 %v315, 0.25
        %v324 = vmul.f32 %v316, 0.25
        %v325 = vrot.slane %v319, 4
        %vm326 = vcmask 1047556
        %v327 = vsel %vm326, %v325, %v317
        %v329 = vunpack.c.l.s4 1983009808
        %v330 = vunpack.c.0.s8 %v329
        %v331 = vperm.slane %v327, %v330
        %v332 = vrot.slane %v320, 4
        %v333 = vsel %vm326, %v332, %v318
        %v335 = vunpack.c.l.s4 1983009808
        %v336 = vunpack.c.0.s8 %v335
        %v337 = vperm.slane %v333, %v336
        %v338 = vrot.slane %v323, 4
        %v339 = vsel %vm326, %v338, %v321
        %v341 = vunpack.c.l.s4 1983009808
        %v342 = vunpack.c.0.s8 %v341
        %v343 = vperm.slane %v339, %v342
        %v344 = vrot.slane %v324, 4
        %v345 = vsel %vm326, %v344, %v322
        %v347 = vunpack.c.l.s4 1983009808
        %v348 = vunpack.c.0.s8 %v347
        %v349 = vperm.slane %v345, %v348
        %v350 = vrot.slane %v337, 4
        %v351 = vsel %vm326, %v350, %v331
        %v352 = vrot.slane %v331, 4
        %v353 = vsel %vm326, %v337, %v352
        %v355 = vunpack.c.l.s4 1934713408
        %v356 = vunpack.c.0.s8 %v355
        %v357 = vperm.slane %v351, %v356
        %v359 = vunpack.c.l.s4 1934713408
        %v360 = vunpack.c.0.s8 %v359
        %v361 = vperm.slane %v353, %v360
        %v362 = vrot.slane %v349, 4
        %v363 = vsel %vm326, %v362, %v343
        %v364 = vrot.slane %v343, 4
        %v365 = vsel %vm326, %v349, %v364
        %v367 = vunpack.c.l.s4 1934713408
        %v368 = vunpack.c.0.s8 %v367
        %v369 = vperm.slane %v363, %v368
        %v371 = vunpack.c.l.s4 1934713408
        %v372 = vunpack.c.0.s8 %v371
        %v373 = vperm.slane %v365, %v372
        %v374 = vrot.slane %v369, 4
        %v375 = vsel %vm326, %v374, %v357
        %v376 = vrot.slane %v357, 4
        %v377 = vsel %vm326, %v369, %v376
        %v378 = vrot.slane %v373, 4
        %v379 = vsel %vm326, %v378, %v361
        %v380 = vrot.slane %v361, 4
        %v381 = vsel %vm326, %v373, %v380
        %v382 = vld [vmem:[%s264] sm:$0xf]
        %v383 = vld [vmem:[%s264 + $0x4] sm:$0xf]
        %v384 = vld [vmem:[%s264 + $0x8] sm:$0xf]
        %v385 = vld [vmem:[%s264 + $0xc] sm:$0xf]
        %v386 = vld [vmem:[%s264 + $0x10] sm:$0xf]
        %v387 = vld [vmem:[%s264 + $0x14] sm:$0xf]
        %v388 = vld [vmem:[%s264 + $0x18] sm:$0xf]
        %v389 = vld [vmem:[%s264 + $0x1c] sm:$0xf]
        %v390 = vrot.slane %v384, 4
        %v391 = vsel %vm326, %v390, %v382
        %v393 = vunpack.c.l.s4 1983009808
        %v394 = vunpack.c.0.s8 %v393
        %v395 = vperm.slane %v391, %v394
        %v396 = vrot.slane %v385, 4
        %v397 = vsel %vm326, %v396, %v383
        %v399 = vunpack.c.l.s4 1983009808
        %v400 = vunpack.c.0.s8 %v399
        %v401 = vperm.slane %v397, %v400
        %v402 = vrot.slane %v388, 4
        %v403 = vsel %vm326, %v402, %v386
        %v405 = vunpack.c.l.s4 1983009808
        %v406 = vunpack.c.0.s8 %v405
        %v407 = vperm.slane %v403, %v406
        %v408 = vrot.slane %v389, 4
        %v409 = vsel %vm326, %v408, %v387
        %v411 = vunpack.c.l.s4 1983009808
        %v412 = vunpack.c.0.s8 %v411
        %v413 = vperm.slane %v409, %v412
        %v414 = vrot.slane %v401, 4
        %v415 = vsel %vm326, %v414, %v395
        %v416 = vrot.slane %v395, 4
        %v417 = vsel %vm326, %v401, %v416
        %v419 = vunpack.c.l.s4 1934713408
        %v420 = vunpack.c.0.s8 %v419
        %v421 = vperm.slane %v415, %v420
        %v423 = vunpack.c.l.s4 1934713408
        %v424 = vunpack.c.0.s8 %v423
        %v425 = vperm.slane %v417, %v424
        %v426 = vrot.slane %v413, 4
        %v427 = vsel %vm326, %v426, %v407
        %v428 = vrot.slane %v407, 4
        %v429 = vsel %vm326, %v413, %v428
        %v431 = vunpack.c.l.s4 1934713408
        %v432 = vunpack.c.0.s8 %v431
        %v433 = vperm.slane %v427, %v432
        %v435 = vunpack.c.l.s4 1934713408
        %v436 = vunpack.c.0.s8 %v435
        %v437 = vperm.slane %v429, %v436
        %v438 = vrot.slane %v433, 4
        %v439 = vsel %vm326, %v438, %v421
        %v440 = vrot.slane %v421, 4
        %v441 = vsel %vm326, %v433, %v440
        %v442 = vrot.slane %v437, 4
        %v443 = vsel %vm326, %v442, %v425
        %v444 = vrot.slane %v425, 4
        %v445 = vsel %vm326, %v437, %v444
        %v446 = vld [vmem:[%s274] sm:$0xf]
        %v447 = vld [vmem:[%s274 + $0x4] sm:$0xf]
        %v448 = vld [vmem:[%s274 + $0x8] sm:$0xf]
        %v449 = vld [vmem:[%s274 + $0xc] sm:$0xf]
        %v450 = vld [vmem:[%s274 + $0x10] sm:$0xf]
        %v451 = vld [vmem:[%s274 + $0x14] sm:$0xf]
        %v452 = vld [vmem:[%s274 + $0x18] sm:$0xf]
        %v453 = vld [vmem:[%s274 + $0x1c] sm:$0xf]
        %v454 = vrot.slane %v448, 4
        %v455 = vsel %vm326, %v454, %v446
        %v457 = vunpack.c.l.s4 1983009808
        %v458 = vunpack.c.0.s8 %v457
        %v459 = vperm.slane %v455, %v458
        %v460 = vrot.slane %v449, 4
        %v461 = vsel %vm326, %v460, %v447
        %v463 = vunpack.c.l.s4 1983009808
        %v464 = vunpack.c.0.s8 %v463
        %v465 = vperm.slane %v461, %v464
        %v466 = vrot.slane %v452, 4
        %v467 = vsel %vm326, %v466, %v450
        %v469 = vunpack.c.l.s4 1983009808
        %v470 = vunpack.c.0.s8 %v469
        %v471 = vperm.slane %v467, %v470
        %v472 = vrot.slane %v453, 4
        %v473 = vsel %vm326, %v472, %v451
        %v475 = vunpack.c.l.s4 1983009808
        %v476 = vunpack.c.0.s8 %v475
        %v477 = vperm.slane %v473, %v476
        %v478 = vrot.slane %v465, 4
        %v479 = vsel %vm326, %v478, %v459
        %v480 = vrot.slane %v459, 4
        %v481 = vsel %vm326, %v465, %v480
        %v483 = vunpack.c.l.s4 1934713408
        %v484 = vunpack.c.0.s8 %v483
        %v485 = vperm.slane %v479, %v484
        %v487 = vunpack.c.l.s4 1934713408
        %v488 = vunpack.c.0.s8 %v487
        %v489 = vperm.slane %v481, %v488
        %v490 = vrot.slane %v477, 4
        %v491 = vsel %vm326, %v490, %v471
        %v492 = vrot.slane %v471, 4
        %v493 = vsel %vm326, %v477, %v492
        %v495 = vunpack.c.l.s4 1934713408
        %v496 = vunpack.c.0.s8 %v495
        %v497 = vperm.slane %v491, %v496
        %v499 = vunpack.c.l.s4 1934713408
        %v500 = vunpack.c.0.s8 %v499
        %v501 = vperm.slane %v493, %v500
        %v502 = vrot.slane %v497, 4
        %v503 = vsel %vm326, %v502, %v485
        %v504 = vrot.slane %v485, 4
        %v505 = vsel %vm326, %v497, %v504
        %v506 = vrot.slane %v501, 4
        %v507 = vsel %vm326, %v506, %v489
        %v508 = vrot.slane %v489, 4
        %v509 = vsel %vm326, %v501, %v508
        %vm510 = vcmask 130048
        %v512 = vsel %vm510, %v375, 0
        %v515 = vsel %vm510, %v439, 0
        %517 = vmatpush.xpose.msra.mxu0 0.0
        %518 = vmatpush.xpose.msra.mxu0 0.0
        %519 = vmatpush.xpose.msra.mxu0 0.0
        %520 = vmatpush.xpose.msra.mxu0 0.0
        %521 = vmatpush.xpose.msra.mxu0 0.0
        %522 = vmatpush.xpose.msra.mxu0 0.0
        %523 = vmatpush.xpose.msra.mxu0 0.0
        %524 = vmatpush.xpose.msra.mxu0 0.0
        %525 = vmatpush.xpose.msra.mxu0 0.0
        %526 = vmatpush.xpose.msra.mxu0 0.0
        %527 = vmatpush.xpose.msra.mxu0 0.0
        %528 = vmatpush.xpose.msra.mxu0 0.0
        %529 = vmatpush.xpose.msra.mxu0 0.0
        %530 = vmatpush.xpose.msra.mxu0 0.0
        %531 = vmatpush.xpose.msra.mxu0 0.0
        %532 = vmatpush.xpose.msra.mxu0 %v515
        %533 = vmatmul.f32.gmra.mxu0 %v512
        %v534 = vpop.f32.mrf.mxu0
        %v535 = vadd.f32 0.0, %v534
        %536 = vdwg.mxu0
        %v538 = vsel %vm510, %v377, 0
        %v541 = vsel %vm510, %v441, 0
        %543 = vmatpush.xpose.msra.mxu0 0.0
        %544 = vmatpush.xpose.msra.mxu0 0.0
        %545 = vmatpush.xpose.msra.mxu0 0.0
        %546 = vmatpush.xpose.msra.mxu0 0.0
        %547 = vmatpush.xpose.msra.mxu0 0.0
        %548 = vmatpush.xpose.msra.mxu0 0.0
        %549 = vmatpush.xpose.msra.mxu0 0.0
        %550 = vmatpush.xpose.msra.mxu0 0.0
        %551 = vmatpush.xpose.msra.mxu0 0.0
        %552 = vmatpush.xpose.msra.mxu0 0.0
        %553 = vmatpush.xpose.msra.mxu0 0.0
        %554 = vmatpush.xpose.msra.mxu0 0.0
        %555 = vmatpush.xpose.msra.mxu0 0.0
        %556 = vmatpush.xpose.msra.mxu0 0.0
        %557 = vmatpush.xpose.msra.mxu0 0.0
        %558 = vmatpush.xpose.msra.mxu0 %v541
        %559 = vmatmul.f32.gmra.mxu0 %v538
        %v560 = vpop.f32.mrf.mxu0
        %v561 = vadd.f32 0.0, %v560
        %562 = vdwg.mxu0
        %v564 = vsel %vm510, %v379, 0
        %v567 = vsel %vm510, %v443, 0
        %569 = vmatpush.xpose.msra.mxu0 0.0
        %570 = vmatpush.xpose.msra.mxu0 0.0
        %571 = vmatpush.xpose.msra.mxu0 0.0
        %572 = vmatpush.xpose.msra.mxu0 0.0
        %573 = vmatpush.xpose.msra.mxu0 0.0
        %574 = vmatpush.xpose.msra.mxu0 0.0
        %575 = vmatpush.xpose.msra.mxu0 0.0
        %576 = vmatpush.xpose.msra.mxu0 0.0
        %577 = vmatpush.xpose.msra.mxu0 0.0
        %578 = vmatpush.xpose.msra.mxu0 0.0
        %579 = vmatpush.xpose.msra.mxu0 0.0
        %580 = vmatpush.xpose.msra.mxu0 0.0
        %581 = vmatpush.xpose.msra.mxu0 0.0
        %582 = vmatpush.xpose.msra.mxu0 0.0
        %583 = vmatpush.xpose.msra.mxu0 0.0
        %584 = vmatpush.xpose.msra.mxu0 %v567
        %585 = vmatmul.f32.gmra.mxu0 %v564
        %v586 = vpop.f32.mrf.mxu0
        %v587 = vadd.f32 0.0, %v586
        %588 = vdwg.mxu0
        %v590 = vsel %vm510, %v381, 0
        %v593 = vsel %vm510, %v445, 0
        %595 = vmatpush.xpose.msra.mxu0 0.0
        %596 = vmatpush.xpose.msra.mxu0 0.0
        %597 = vmatpush.xpose.msra.mxu0 0.0
        %598 = vmatpush.xpose.msra.mxu0 0.0
        %599 = vmatpush.xpose.msra.mxu0 0.0
        %600 = vmatpush.xpose.msra.mxu0 0.0
        %601 = vmatpush.xpose.msra.mxu0 0.0
        %602 = vmatpush.xpose.msra.mxu0 0.0
        %603 = vmatpush.xpose.msra.mxu0 0.0
        %604 = vmatpush.xpose.msra.mxu0 0.0
        %605 = vmatpush.xpose.msra.mxu0 0.0
        %606 = vmatpush.xpose.msra.mxu0 0.0
        %607 = vmatpush.xpose.msra.mxu0 0.0
        %608 = vmatpush.xpose.msra.mxu0 0.0
        %609 = vmatpush.xpose.msra.mxu0 0.0
        %610 = vmatpush.xpose.msra.mxu0 %v593
        %611 = vmatmul.f32.gmra.mxu0 %v590
        %v612 = vpop.f32.mrf.mxu0
        %v613 = vadd.f32 0.0, %v612
        %614 = vdwg.mxu0
        %vm615 = vcmask 64512
        %v616 = vsel %vm615, %v535, -inf
        %617 = vmax.xlane.f32.xlu0 %v616
        %v618 = vpop.xlane.xlu0 %617
        %v619 = vsel %vm615, %v561, -inf
        %620 = vmax.xlane.f32.xlu0 %v619
        %v621 = vpop.xlane.xlu0 %620
        %v622 = vsel %vm615, %v587, -inf
        %623 = vmax.xlane.f32.xlu0 %v622
        %v624 = vpop.xlane.xlu0 %623
        %v625 = vsel %vm615, %v613, -inf
        %626 = vmax.xlane.f32.xlu0 %v625
        %v627 = vpop.xlane.xlu0 %626
        %v628 = vsub.f32 %v535, %v618
        %v629 = vsub.f32 %v561, %v621
        %v630 = vsub.f32 %v587, %v624
        %v631 = vsub.f32 %v613, %v627
        %v632 = vmul.f32 %v628, 1.442695
        %v633 = vpow.pop %v632
        %v634 = vmul.f32 %v629, 1.442695
        %v635 = vpow.pop %v634
        %v636 = vmul.f32 %v630, 1.442695
        %v637 = vpow.pop %v636
        %v638 = vmul.f32 %v631, 1.442695
        %v639 = vpow.pop %v638
        %v640 = vsel %vm615, %v633, 0.0
        %641 = vadd.xlane.f32.xlu0 %v640
        %v642 = vpop.xlane.xlu0 %641
        %v643 = vsel %vm615, %v635, 0.0
        %644 = vadd.xlane.f32.xlu0 %v643
        %v645 = vpop.xlane.xlu0 %644
        %v646 = vsel %vm615, %v637, 0.0
        %647 = vadd.xlane.f32.xlu0 %v646
        %v648 = vpop.xlane.xlu0 %647
        %v649 = vsel %vm615, %v639, 0.0
        %650 = vadd.xlane.f32.xlu0 %v649
        %v651 = vpop.xlane.xlu0 %650
        %v652 = vrcp.pop %v642
        %v653 = vrcp.pop %v645
        %v654 = vrcp.pop %v648
        %v655 = vrcp.pop %v651
        %v657 = vsel %vm615, %v633, 0
        %659 = vmatpush.msra.mxu0 0.0
        %660 = vmatpush.msra.mxu0 0.0
        %661 = vmatpush.msra.mxu0 0.0
        %662 = vmatpush.msra.mxu0 0.0
        %663 = vmatpush.msra.mxu0 0.0
        %664 = vmatpush.msra.mxu0 0.0
        %665 = vmatpush.msra.mxu0 0.0
        %666 = vmatpush.msra.mxu0 0.0
        %667 = vmatpush.msra.mxu0 0.0
        %668 = vmatpush.msra.mxu0 0.0
        %669 = vmatpush.msra.mxu0 0.0
        %670 = vmatpush.msra.mxu0 0.0
        %671 = vmatpush.msra.mxu0 0.0
        %672 = vmatpush.msra.mxu0 0.0
        %673 = vmatpush.msra.mxu0 0.0
        %674 = vmatpush.msra.mxu0 %v503
        %675 = vmatmul.f32.gmra.mxu0 %v657
        %v676 = vpop.f32.mrf.mxu0
        %v677 = vadd.f32 0.0, %v676
        %678 = vdwg.mxu0
        %v680 = vsel %vm615, %v635, 0
        %682 = vmatpush.msra.mxu0 0.0
        %683 = vmatpush.msra.mxu0 0.0
        %684 = vmatpush.msra.mxu0 0.0
        %685 = vmatpush.msra.mxu0 0.0
        %686 = vmatpush.msra.mxu0 0.0
        %687 = vmatpush.msra.mxu0 0.0
        %688 = vmatpush.msra.mxu0 0.0
        %689 = vmatpush.msra.mxu0 0.0
        %690 = vmatpush.msra.mxu0 0.0
        %691 = vmatpush.msra.mxu0 0.0
        %692 = vmatpush.msra.mxu0 0.0
        %693 = vmatpush.msra.mxu0 0.0
        %694 = vmatpush.msra.mxu0 0.0
        %695 = vmatpush.msra.mxu0 0.0
        %696 = vmatpush.msra.mxu0 0.0
        %697 = vmatpush.msra.mxu0 %v505
        %698 = vmatmul.f32.gmra.mxu0 %v680
        %v699 = vpop.f32.mrf.mxu0
        %v700 = vadd.f32 0.0, %v699
        %701 = vdwg.mxu0
        %v703 = vsel %vm615, %v637, 0
        %705 = vmatpush.msra.mxu0 0.0
        %706 = vmatpush.msra.mxu0 0.0
        %707 = vmatpush.msra.mxu0 0.0
        %708 = vmatpush.msra.mxu0 0.0
        %709 = vmatpush.msra.mxu0 0.0
        %710 = vmatpush.msra.mxu0 0.0
        %711 = vmatpush.msra.mxu0 0.0
        %712 = vmatpush.msra.mxu0 0.0
        %713 = vmatpush.msra.mxu0 0.0
        %714 = vmatpush.msra.mxu0 0.0
        %715 = vmatpush.msra.mxu0 0.0
        %716 = vmatpush.msra.mxu0 0.0
        %717 = vmatpush.msra.mxu0 0.0
        %718 = vmatpush.msra.mxu0 0.0
        %719 = vmatpush.msra.mxu0 0.0
        %720 = vmatpush.msra.mxu0 %v507
        %721 = vmatmul.f32.gmra.mxu0 %v703
        %v722 = vpop.f32.mrf.mxu0
        %v723 = vadd.f32 0.0, %v722
        %724 = vdwg.mxu0
        %v726 = vsel %vm615, %v639, 0
        %728 = vmatpush.msra.mxu0 0.0
        %729 = vmatpush.msra.mxu0 0.0
        %730 = vmatpush.msra.mxu0 0.0
        %731 = vmatpush.msra.mxu0 0.0
        %732 = vmatpush.msra.mxu0 0.0
        %733 = vmatpush.msra.mxu0 0.0
        %734 = vmatpush.msra.mxu0 0.0
        %735 = vmatpush.msra.mxu0 0.0
        %736 = vmatpush.msra.mxu0 0.0
        %737 = vmatpush.msra.mxu0 0.0
        %738 = vmatpush.msra.mxu0 0.0
        %739 = vmatpush.msra.mxu0 0.0
        %740 = vmatpush.msra.mxu0 0.0
        %741 = vmatpush.msra.mxu0 0.0
        %742 = vmatpush.msra.mxu0 0.0
        %743 = vmatpush.msra.mxu0 %v509
        %744 = vmatmul.f32.gmra.mxu0 %v726
        %v745 = vpop.f32.mrf.mxu0
        %v746 = vadd.f32 0.0, %v745
        %747 = vdwg.mxu0
        %v748 = vmul.f32 %v677, %v652
        %v749 = vmul.f32 %v700, %v653
        %v750 = vmul.f32 %v723, %v654
        %v751 = vmul.f32 %v746, %v655
        %v752 = vrot.slane %v750, 4
        %v753 = vsel %vm326, %v752, %v748
        %v754 = vrot.slane %v748, 4
        %v755 = vsel %vm326, %v750, %v754
        %v757 = vunpack.c.l.s4 1983009808
        %v758 = vunpack.c.0.s8 %v757
        %v759 = vperm.slane %v753, %v758
        %v761 = vunpack.c.l.s4 1983009808
        %v762 = vunpack.c.0.s8 %v761
        %v763 = vperm.slane %v755, %v762
        %v764 = vrot.slane %v751, 4
        %v765 = vsel %vm326, %v764, %v749
        %v766 = vrot.slane %v749, 4
        %v767 = vsel %vm326, %v751, %v766
        %v769 = vunpack.c.l.s4 1983009808
        %v770 = vunpack.c.0.s8 %v769
        %v771 = vperm.slane %v765, %v770
        %v773 = vunpack.c.l.s4 1983009808
        %v774 = vunpack.c.0.s8 %v773
        %v775 = vperm.slane %v767, %v774
        %v776 = vrot.slane %v771, 4
        %v777 = vsel %vm326, %v776, %v759
        %v778 = vrot.slane %v759, 4
        %v779 = vsel %vm326, %v771, %v778
        %v781 = vunpack.c.l.s4 1934713408
        %v782 = vunpack.c.0.s8 %v781
        %v783 = vperm.slane %v777, %v782
        %v785 = vunpack.c.l.s4 1934713408
        %v786 = vunpack.c.0.s8 %v785
        %v787 = vperm.slane %v779, %v786
        %v788 = vrot.slane %v775, 4
        %v789 = vsel %vm326, %v788, %v763
        %v790 = vrot.slane %v763, 4
        %v791 = vsel %vm326, %v775, %v790
        %v793 = vunpack.c.l.s4 1934713408
        %v794 = vunpack.c.0.s8 %v793
        %v795 = vperm.slane %v789, %v794
        %v797 = vunpack.c.l.s4 1934713408
        %v798 = vunpack.c.0.s8 %v797
        %v799 = vperm.slane %v791, %v798
        %v800 = vrot.slane %v783, 4
        %v801 = vsel %vm326, 0.0, %v800
        %v802 = vrot.slane %v787, 4
        %v803 = vsel %vm326, 0.0, %v802
        %v804 = vrot.slane %v795, 4
        %v805 = vsel %vm326, 0.0, %v804
        %v806 = vrot.slane %v799, 4
        %v807 = vsel %vm326, 0.0, %v806
        %v808 = vsel %vm326, %v802, %v783
        %v810 = vunpack.c.l.s4 1983009808
        %v811 = vunpack.c.0.s8 %v810
        %v812 = vperm.slane %v808, %v811
        %v813 = vrot.slane %v803, 4
        %v814 = vsel %vm326, %v813, %v801
        %v816 = vunpack.c.l.s4 1983009808
        %v817 = vunpack.c.0.s8 %v816
        %v818 = vperm.slane %v814, %v817
        %v819 = vsel %vm326, %v806, %v795
        %v821 = vunpack.c.l.s4 1983009808
        %v822 = vunpack.c.0.s8 %v821
        %v823 = vperm.slane %v819, %v822
        %v824 = vrot.slane %v807, 4
        %v825 = vsel %vm326, %v824, %v805
        %v827 = vunpack.c.l.s4 1983009808
        %v828 = vunpack.c.0.s8 %v827
        %v829 = vperm.slane %v825, %v828
        %v830 = vrot.slane %v818, 4
        %v831 = vsel %vm326, %v830, %v812
        %v832 = vrot.slane %v812, 4
        %v833 = vsel %vm326, %v818, %v832
        %v835 = vunpack.c.l.s4 1934713408
        %v836 = vunpack.c.0.s8 %v835
        %v837 = vperm.slane %v831, %v836
        %v839 = vunpack.c.l.s4 1934713408
        %v840 = vunpack.c.0.s8 %v839
        %v841 = vperm.slane %v833, %v840
        %v842 = vrot.slane %v829, 4
        %v843 = vsel %vm326, %v842, %v823
        %v844 = vrot.slane %v823, 4
        %v845 = vsel %vm326, %v829, %v844
        %v847 = vunpack.c.l.s4 1934713408
        %v848 = vunpack.c.0.s8 %v847
        %v849 = vperm.slane %v843, %v848
        %v851 = vunpack.c.l.s4 1934713408
        %v852 = vunpack.c.0.s8 %v851
        %v853 = vperm.slane %v845, %v852
        %v854 = vrot.slane %v849, 4
        %v855 = vsel %vm326, %v854, %v837
        %v856 = vrot.slane %v837, 4
        %v857 = vsel %vm326, %v849, %v856
        %v858 = vrot.slane %v853, 4
        %v859 = vsel %vm326, %v858, %v841
        %v860 = vrot.slane %v841, 4
        %v861 = vsel %vm326, %v853, %v860
        %863 = vrot.lane.b32.xlu0 %v857, 16
        %v864 = vpop.permute.xlu0 %863
        %867 = vrot.lane.b32.xlu0 %v859, 32
        %v868 = vpop.permute.xlu0 %867
        %871 = vrot.lane.b32.xlu0 %v861, 48
        %v872 = vpop.permute.xlu0 %871
        %v874 = vsel %vm510, %v855, %v864
        %vm875 = vcmask 261120
        %v876 = vsel %vm875, %v874, %v868
        %vm877 = vcmask 392192
        %v878 = vsel %vm877, %v876, %v872
        %vm879 = vcmask 523264
        %880 = vst.msk [vmem:[%s307] sm:$0xff] %vm879, %v878
        %s881 = sand.u32 %s140, 1
        %s882 = scalar_lea.sflag [#allocation4], %s881
        %s883 = sand.u32 %s140, 1
        %s884 = smul.addr %s883, 8
        %s885 = scalar_lea.vmem [#allocation8], %s884
        // Predicated region
        $region45: #{tpu_custom_call.1} parent=31 // pred_check
          %p886 = pneg %p150
        $region46: #{tpu_custom_call.1} parent=31 // pred_check_branch
          %888 = sbr.rel (%p886) target = $region48
        $region47: #{tpu_custom_call.1} parent=31 // pred_region
          %890 = vsyncadd %s882, 0
          %s891 = sadd.s32 %s29, %s30
          %s892 = sadd.s32 %s891, %s28
          %s893 = smul.addr %s892, 8
          %s894 = scalar_lea.hbm %s3, %s893
          %s896 = sshll.u32 %s885, 4
          %s897 = int_to_ptr.vmem [resolvable:$true] %s896
          %s898 = sshll.u32 %s894, 4
          %s899 = int_to_ptr.hbm [resolvable:$true] %s898
          %901 = dma.vmem_to_hbm [thread:$0]  %s897, 128, %s899, %s882
        $region48: #{tpu_custom_call.1} parent=31 // pred_fallthru
          _
      $region32: #{tpu_custom_call.1} parent=5 // pred_fallthru
        _
      %p902 = scmp.le.s32.totalorder 2, %s18
      // Predicated region
      $region49: #{tpu_custom_call.1} parent=5 // pred_check
        %p903 = pneg %p902
      $region50: #{tpu_custom_call.1} parent=5 // pred_check_branch
        %905 = sbr.rel (%p903) target = $region52
      $region51: #{tpu_custom_call.1} parent=5 // pred_region
        %s906 = ssub.s32 %s18, 2
        // Predicated region
        $region53: #{tpu_custom_call.1} parent=51 // pred_check
          %p907 = pneg %p156
        $region54: #{tpu_custom_call.1} parent=51 // pred_check_branch
          %909 = sbr.rel (%p907) target = $region56
        $region55: #{tpu_custom_call.1} parent=51 // pred_region
          %s910 = sand.u32 %s141, 1
          %s911 = scalar_lea.sflag [#allocation4], %s910
          %s912 = sand.u32 %s141, 1
          %s913 = smul.addr %s912, 8
          %s914 = scalar_lea.vmem [#allocation8], %s913
          %916 = dma.done %s911, 128
        $region56: #{tpu_custom_call.1} parent=51 // pred_fallthru
          _
      $region52: #{tpu_custom_call.1} parent=5 // pred_fallthru
        _
    $region6: #{tpu_custom_call.1} parent=1 // loop_footer
      %s22 = sadd.s32 1, %s18
    $region7: #{tpu_custom_call.1} parent=1 // loop_footer_branch
      %17 = sbr.rel target = $region3
    $region8: #{tpu_custom_call.1} parent=1 // loop_exit
      _
    %917 = vsyncpa [#allocation3], 1
    %s918 = scalar_lea.sflag [#allocation3], 1
    %919 = vsyncpa %s918, 1
    %920 = vsyncpa [#allocation6], 1
    %s921 = scalar_lea.sflag [#allocation6], 1
    %922 = vsyncpa %s921, 1
    %923 = vsyncpa [#allocation4], 1
    %s924 = scalar_lea.sflag [#allocation4], 1
    %925 = vsyncpa %s924, 1

</llo_original>
